<compile_context>
chip_gen: v7x
topology: tpu7x:2x2x1
jax: 0.10.0
libtpu: 0.0.40
codegen_flags: <defaults>
</compile_context>

<pallas_src>
import jax
import jax.numpy as jnp
from jax.experimental import pallas as pl
from jax.experimental.pallas import tpu as pltpu

# ---- problem sizes (small, lane-aligned) ----
B, N, D = 2, 16, 128          # batch, nodes, feature dim
C, H = 128, 128               # context dim, MLP hidden dim
T = 8                         # number of diffusion steps
BETA_1, BETA_T = 1e-4, 0.02


# --------------------------------------------------------------------------
# Pallas kernel: one grid step = one batch element (N x D block).
#   x_t  = sqrt_ab[t_b] * x_0 + sqrt(1 - ab[t_b]) * noise        (f32)
#   eps  = relu(x_t @ w1 + bias_b) @ w2                           (bf16 MXU, f32 acc)
#   loss = (eps - noise)^2                                        (f32, reduction='none')
# --------------------------------------------------------------------------
def trainer_kernel(t_ref, sab_ref, s1mab_ref,          # scalar-prefetch (SMEM)
                   x0_ref, noise_ref, bias_ref, w1_ref, w2_ref,
                   loss_ref):
    b = pl.program_id(0)
    tb = t_ref[b]                                      # int32 scalar from SMEM
    ca = sab_ref[tb]                                   # sqrt(alphas_bar[t_b])
    cb = s1mab_ref[tb]                                 # sqrt(1 - alphas_bar[t_b])

    x0 = x0_ref[...]                                   # (N, D) f32
    noise = noise_ref[...]                             # (N, D) f32

    # forward diffusion q(x_t | x_0): scalar splat, no (M,1) broadcast operand
    x_t = ca * x0 + cb * noise                         # (N, D) f32

    # synthetic eps-model (stand-in for self.model(t, x_t, context, node_mask))
    h = jnp.dot(x_t.astype(jnp.bfloat16), w1_ref[...],
                preferred_element_type=jnp.float32)    # (N, H) f32
    h = jnp.maximum(h + bias_ref[...], 0.0)            # bias is (1, H), broadcasts
    eps = jnp.dot(h.astype(jnp.bfloat16), w2_ref[...],
                  preferred_element_type=jnp.float32)  # (N, D) f32

    # F.mse_loss(pred_noise, noise, reduction='none')
    diff = eps - noise
    loss_ref[...] = diff * diff


@jax.jit
def trainer_forward(key, node_loc, context, params):
    """Algorithm 1 (training objective). Returns (loss, t, noise)."""
    sqrt_ab = params["sqrt_alphas_bar"]                 # (T,) f32
    sqrt_1mab = params["sqrt_one_minus_alphas_bar"]     # (T,) f32
    w1, wc, w2, temb = params["w1"], params["wc"], params["w2"], params["temb"]

    k_t, k_noise = jax.random.split(key)
    # t = torch.randint(T, size=(B,)); noise = torch.randn_like(x_0)
    t = jax.random.randint(k_t, (B,), 0, T, dtype=jnp.int32)
    noise = jax.random.normal(k_noise, (B, N, D), dtype=jnp.float32)
    # TODO(synk): noise could be drawn in-kernel via pltpu.prng_* to drop this
    # dispatch, but that changes the RNG stream vs jax.random.

    # per-batch context/time bias: only B unique rows -> computed once here,
    # so the kernel's first layer is a single K=128 contraction.
    bias = (context @ wc + temb[t])[:, None, :].astype(jnp.float32)   # (B, 1, H)

    # TODO(synk): node_mask is accepted by the torch module but its semantics
    # depend on the (unspecified) eps-model, so it is not applied here.
    grid_spec = pltpu.PrefetchScalarGridSpec(
        num_scalar_prefetch=3,                 # t, sqrt_ab, sqrt_1mab -> SMEM
        grid=(B,),
        in_specs=[
            pl.BlockSpec((None, N, D), lambda b, t, sab, s1m: (b, 0, 0)),  # x_0
            pl.BlockSpec((None, N, D), lambda b, t, sab, s1m: (b, 0, 0)),  # noise
            pl.BlockSpec((None, 1, H), lambda b, t, sab, s1m: (b, 0, 0)),  # bias
            pl.BlockSpec((D, H),       lambda b, t, sab, s1m: (0, 0)),     # w1 (resident)
            pl.BlockSpec((H, D),       lambda b, t, sab, s1m: (0, 0)),     # w2 (resident)
        ],
        out_specs=pl.BlockSpec((None, N, D), lambda b, t, sab, s1m: (b, 0, 0)),
    )

    loss = pl.pallas_call(
        trainer_kernel,
        out_shape=jax.ShapeDtypeStruct((B, N, D), jnp.float32),
        grid_spec=grid_spec,
        compiler_params=pltpu.CompilerParams(
            dimension_semantics=("parallel",)),        # batch axis -> both TCs on v7x
    )(t, sqrt_ab, sqrt_1mab, node_loc, noise, bias, w1, w2)

    return loss, t, noise


# --------------------------------------------------------------------------
# Schedule buffers, exactly as in GaussianDiffusionTrainer.__init__.
# --------------------------------------------------------------------------
def make_schedule(beta_1, beta_T, num_T):
    betas = jnp.linspace(beta_1, beta_T, num_T, dtype=jnp.float32)
    alphas = 1.0 - betas
    alphas_bar = jnp.cumprod(alphas)
    return jnp.sqrt(alphas_bar), jnp.sqrt(1.0 - alphas_bar)


if __name__ == "__main__":
    key = jax.random.PRNGKey(0)
    k_x, k_ctx, k_w1, k_wc, k_w2, k_temb, k_run = jax.random.split(key, 7)

    node_loc = jax.random.normal(k_x, (B, N, D), dtype=jnp.float32)
    context = jax.random.normal(k_ctx, (B, C), dtype=jnp.float32)

    # deterministic synthetic eps-model weights
    w1 = (jax.random.normal(k_w1, (D, H), dtype=jnp.float32)
          / jnp.sqrt(D)).astype(jnp.bfloat16)                       # (D, H) bf16
    wc = jax.random.normal(k_wc, (C, H), dtype=jnp.float32) / jnp.sqrt(C)   # (C, H) f32
    w2 = (jax.random.normal(k_w2, (H, D), dtype=jnp.float32)
          / jnp.sqrt(H)).astype(jnp.bfloat16)                       # (H, D) bf16
    temb = 0.1 * jax.random.normal(k_temb, (T, H), dtype=jnp.float32)       # (T, H)

    sqrt_ab, sqrt_1mab = make_schedule(BETA_1, BETA_T, T)
    params = {
        "sqrt_alphas_bar": sqrt_ab,
        "sqrt_one_minus_alphas_bar": sqrt_1mab,
        "w1": w1,
        "wc": wc,
        "w2": w2,
        "temb": temb,
    }

    loss, t, noise = trainer_forward(k_run, node_loc, context, params)
    loss = jax.block_until_ready(loss)

    # pure-JAX reference mirroring the kernel math (same bf16 casts)
    ca = sqrt_ab[t][:, None, None]
    cb = sqrt_1mab[t][:, None, None]
    x_t = ca * node_loc + cb * noise
    bias_ref = (context @ wc + temb[t])[:, None, :]
    h_ref = jnp.einsum("bnd,dh->bnh", x_t.astype(jnp.bfloat16), w1,
                       preferred_element_type=jnp.float32)
    h_ref = jnp.maximum(h_ref + bias_ref, 0.0)
    eps_ref = jnp.einsum("bnh,hd->bnd", h_ref.astype(jnp.bfloat16), w2,
                         preferred_element_type=jnp.float32)
    loss_expected = (eps_ref - noise) ** 2

    assert loss.shape == (B, N, D)
    assert bool(jnp.isfinite(loss).all())
    assert bool(jnp.allclose(loss, loss_expected, rtol=2e-2, atol=2e-2))
    print("KERNEL_OK")
</pallas_src>

<mosaic_0001>
module attributes {stable_mosaic.version = 11 : i64} {
  func.func @trainer_kernel(%arg0: i32, %arg1: memref<2xi32, #tpu.memory_space<smem>>, %arg2: memref<8xf32, #tpu.memory_space<smem>>, %arg3: memref<8xf32, #tpu.memory_space<smem>>, %arg4: memref<1x16x128xf32, #tpu.memory_space<vmem>>, %arg5: memref<1x16x128xf32, #tpu.memory_space<vmem>>, %arg6: memref<1x1x128xf32, #tpu.memory_space<vmem>>, %arg7: memref<128x128xbf16, #tpu.memory_space<vmem>>, %arg8: memref<128x128xbf16, #tpu.memory_space<vmem>>, %arg9: memref<1x16x128xf32, #tpu.memory_space<vmem>>) attributes {dimension_semantics = [#tpu.dimension_semantics<parallel>], iteration_bounds = array<i64: 2>, scalar_prefetch = 3 : i64, scratch_operands = 0 : i64, tpu.core_type = #tpu.core_type<tc>, window_params = [{transform_indices = @transform_0, window_bounds = array<i64: 1, 16, 128>}, {transform_indices = @transform_1, window_bounds = array<i64: 1, 16, 128>}, {transform_indices = @transform_2, window_bounds = array<i64: 1, 1, 128>}, {pipeline_mode = #tpu.pipeline_mode<synchronous>, transform_indices = @transform_3, window_bounds = array<i64: 128, 128>}, {pipeline_mode = #tpu.pipeline_mode<synchronous>, transform_indices = @transform_4, window_bounds = array<i64: 128, 128>}, {transform_indices = @transform_5, window_bounds = array<i64: 1, 16, 128>}]} {
    %0 = arith.index_cast %arg0 : i32 to index
    %1 = memref.load %arg1[%0] : memref<2xi32, #tpu.memory_space<smem>>
    %2 = arith.index_cast %1 : i32 to index
    %3 = memref.load %arg2[%2] : memref<8xf32, #tpu.memory_space<smem>>
    %4 = arith.index_cast %1 : i32 to index
    %5 = memref.load %arg3[%4] : memref<8xf32, #tpu.memory_space<smem>>
    %c0 = arith.constant 0 : index
    %c0_0 = arith.constant 0 : index
    %c0_1 = arith.constant 0 : index
    %6 = vector.load %arg4[%c0, %c0_0, %c0_1] : memref<1x16x128xf32, #tpu.memory_space<vmem>>, vector<1x16x128xf32>
    %7 = vector.shape_cast %6 : vector<1x16x128xf32> to vector<16x128xf32>
    %c0_2 = arith.constant 0 : index
    %c0_3 = arith.constant 0 : index
    %c0_4 = arith.constant 0 : index
    %8 = vector.load %arg5[%c0_2, %c0_3, %c0_4] : memref<1x16x128xf32, #tpu.memory_space<vmem>>, vector<1x16x128xf32>
    %9 = vector.shape_cast %8 : vector<1x16x128xf32> to vector<16x128xf32>
    %10 = vector.broadcast %3 : f32 to vector<16x128xf32>
    %11 = arith.mulf %10, %7 : vector<16x128xf32>
    %12 = vector.broadcast %5 : f32 to vector<16x128xf32>
    %13 = arith.mulf %12, %9 : vector<16x128xf32>
    %14 = arith.addf %11, %13 : vector<16x128xf32>
    %15 = arith.truncf %14 : vector<16x128xf32> to vector<16x128xbf16>
    %c0_5 = arith.constant 0 : index
    %c0_6 = arith.constant 0 : index
    %16 = vector.load %arg7[%c0_5, %c0_6] : memref<128x128xbf16, #tpu.memory_space<vmem>>, vector<128x128xbf16>
    %cst = arith.constant dense<0.000000e+00> : vector<16x128xf32>
    %17 = tpu.matmul %15, %16, %cst {dimension_numbers = #tpu.dot_dimension_numbers<[1], [0], [0], [1], [0, 0, 1, 1], [], []>} : vector<16x128xbf16>, vector<128x128xbf16>, vector<16x128xf32> -> vector<16x128xf32>
    %c0_7 = arith.constant 0 : index
    %c0_8 = arith.constant 0 : index
    %c0_9 = arith.constant 0 : index
    %18 = vector.load %arg6[%c0_7, %c0_8, %c0_9] : memref<1x1x128xf32, #tpu.memory_space<vmem>>, vector<1x1x128xf32>
    %19 = vector.shape_cast %18 : vector<1x1x128xf32> to vector<1x128xf32>
    %20 = vector.broadcast %19 : vector<1x128xf32> to vector<16x128xf32>
    %21 = arith.addf %17, %20 : vector<16x128xf32>
    %cst_10 = arith.constant 0.000000e+00 : f32
    %22 = vector.broadcast %cst_10 : f32 to vector<16x128xf32>
    %23 = arith.maximumf %21, %22 : vector<16x128xf32>
    %24 = arith.truncf %23 : vector<16x128xf32> to vector<16x128xbf16>
    %c0_11 = arith.constant 0 : index
    %c0_12 = arith.constant 0 : index
    %25 = vector.load %arg8[%c0_11, %c0_12] : memref<128x128xbf16, #tpu.memory_space<vmem>>, vector<128x128xbf16>
    %cst_13 = arith.constant dense<0.000000e+00> : vector<16x128xf32>
    %26 = tpu.matmul %24, %25, %cst_13 {dimension_numbers = #tpu.dot_dimension_numbers<[1], [0], [0], [1], [0, 0, 1, 1], [], []>} : vector<16x128xbf16>, vector<128x128xbf16>, vector<16x128xf32> -> vector<16x128xf32>
    %27 = arith.subf %26, %9 : vector<16x128xf32>
    %28 = arith.mulf %27, %27 : vector<16x128xf32>
    %c0_14 = arith.constant 0 : index
    %c0_15 = arith.constant 0 : index
    %c0_16 = arith.constant 0 : index
    %29 = vector.load %arg9[%c0_14, %c0_15, %c0_16] : memref<1x16x128xf32, #tpu.memory_space<vmem>>, vector<1x16x128xf32>
    %30 = vector.shape_cast %29 : vector<1x16x128xf32> to vector<16x128xf32>
    %31 = vector.shape_cast %28 : vector<16x128xf32> to vector<1x16x128xf32>
    tpu.vector_store %arg9[%c0_14, %c0_15, %c0_16], %31 {strides = array<i32>} : memref<1x16x128xf32, #tpu.memory_space<vmem>>, vector<1x16x128xf32>,
    return
  }
  func.func @transform_0(%arg0: i32, %arg1: memref<2xi32, #tpu.memory_space<smem>>, %arg2: memref<8xf32, #tpu.memory_space<smem>>, %arg3: memref<8xf32, #tpu.memory_space<smem>>) -> (i32, i32, i32) {
    %c0_i32 = arith.constant 0 : i32
    %c0_i32_0 = arith.constant 0 : i32
    %c0_i32_1 = arith.constant 0 : i32
    return %arg0, %c0_i32, %c0_i32_0 : i32, i32, i32
  }
  func.func @transform_1(%arg0: i32, %arg1: memref<2xi32, #tpu.memory_space<smem>>, %arg2: memref<8xf32, #tpu.memory_space<smem>>, %arg3: memref<8xf32, #tpu.memory_space<smem>>) -> (i32, i32, i32) {
    %c0_i32 = arith.constant 0 : i32
    %c0_i32_0 = arith.constant 0 : i32
    %c0_i32_1 = arith.constant 0 : i32
    return %arg0, %c0_i32, %c0_i32_0 : i32, i32, i32
  }
  func.func @transform_2(%arg0: i32, %arg1: memref<2xi32, #tpu.memory_space<smem>>, %arg2: memref<8xf32, #tpu.memory_space<smem>>, %arg3: memref<8xf32, #tpu.memory_space<smem>>) -> (i32, i32, i32) {
    %c0_i32 = arith.constant 0 : i32
    %c0_i32_0 = arith.constant 0 : i32
    %c0_i32_1 = arith.constant 0 : i32
    return %arg0, %c0_i32, %c0_i32_0 : i32, i32, i32
  }
  func.func @transform_3(%arg0: i32, %arg1: memref<2xi32, #tpu.memory_space<smem>>, %arg2: memref<8xf32, #tpu.memory_space<smem>>, %arg3: memref<8xf32, #tpu.memory_space<smem>>) -> (i32, i32) {
    %c0_i32 = arith.constant 0 : i32
    %c0_i32_0 = arith.constant 0 : i32
    %c0_i32_1 = arith.constant 0 : i32
    return %c0_i32, %c0_i32_0 : i32, i32
  }
  func.func @transform_4(%arg0: i32, %arg1: memref<2xi32, #tpu.memory_space<smem>>, %arg2: memref<8xf32, #tpu.memory_space<smem>>, %arg3: memref<8xf32, #tpu.memory_space<smem>>) -> (i32, i32) {
    %c0_i32 = arith.constant 0 : i32
    %c0_i32_0 = arith.constant 0 : i32
    %c0_i32_1 = arith.constant 0 : i32
    return %c0_i32, %c0_i32_0 : i32, i32
  }
  func.func @transform_5(%arg0: i32, %arg1: memref<2xi32, #tpu.memory_space<smem>>, %arg2: memref<8xf32, #tpu.memory_space<smem>>, %arg3: memref<8xf32, #tpu.memory_space<smem>>) -> (i32, i32, i32) {
    %c0_i32 = arith.constant 0 : i32
    %c0_i32_0 = arith.constant 0 : i32
    %c0_i32_1 = arith.constant 0 : i32
    return %arg0, %c0_i32, %c0_i32_0 : i32, i32, i32
  }
}

</mosaic_0001>

<llo_original>
// kernel: trainer_forward.17
$region0: #{trainer_forward.17}
  #allocation0 [shape = 'u32[]', space=smem, size = 0x4, offset = 0x4, fixed_abs, tag = 'smem constant byte address 0x4 - core index']
  #allocation1 [shape = 'u32[144,128]{1,0:T(1,128)}', space=vmem, size = 0x12000, scoped, tag = 'internal scratch']
  #allocation2 [shape = 's32[1]{0}', space=sflag, size = 0x4, scoped, tag = 'scoped memory for trainer_forward.17']
  #allocation3 [shape = 'u8[512]{0}', space=smem, size = 0x200, scoped, tag = 'prefetched SMEM operand 0']
  #allocation4 [shape = 'u8[512]{0}', space=smem, size = 0x200, scoped, tag = 'prefetched SMEM operand 1']
  #allocation5 [shape = 'u8[512]{0}', space=smem, size = 0x200, scoped, tag = 'prefetched SMEM operand 2']
  %s0 = inlined_call_operand.vmem [shape: s32[2], index: 0, kind: input, shape index: {}]
  %s1 = inlined_call_operand.vmem [shape: f32[8], index: 1, kind: input, shape index: {}]
  %s2 = inlined_call_operand.vmem [shape: f32[8], index: 2, kind: input, shape index: {}]
  %s3 = inlined_call_operand.vmem [shape: f32[2,16,128], index: 3, kind: input, shape index: {}]
  %s4 = inlined_call_operand.vmem [shape: f32[2,16,128], index: 4, kind: input, shape index: {}]
  %s5 = inlined_call_operand.vmem [shape: f32[2,1,128], index: 5, kind: input, shape index: {}]
  %s6 = inlined_call_operand.vmem [shape: bf16[128,128], index: 6, kind: input, shape index: {}]
  %s7 = inlined_call_operand.vmem [shape: bf16[128,128], index: 7, kind: input, shape index: {}]
  %s8 = inlined_call_operand.hbm [shape: f32[2,16,128], index: 8, kind: output, shape index: {}]
  %s9 = sld [smem:[#allocation0]]
  $region53: #{trainer_forward.17} parent=0
    _
  %s11 = ssub.s32 1, %s9
  %s12 = scalar_select 0, %s11, %s9
  %s13 = sshll.u32 %s0, 4
  %s14 = int_to_ptr.vmem [resolvable:$true] %s13
  %16 = dma.vmem_to_smem %s14, 16, [#allocation3], [#allocation2]
  %s17 = sshll.u32 %s1, 4
  %s18 = int_to_ptr.vmem [resolvable:$true] %s17
  %20 = dma.vmem_to_smem %s18, 16, [#allocation4], [#allocation2]
  %s21 = sshll.u32 %s2, 4
  %s22 = int_to_ptr.vmem [resolvable:$true] %s21
  %24 = dma.vmem_to_smem %s22, 16, [#allocation5], [#allocation2]
  %25 = dma.done [#allocation2], 48
  %26 = sfence
  $region1: #{trainer_forward.17} parent=0
    #allocation6 [shape = 'u8[16384]{0}', space=vmem, size = 0x4000, scoped, tag = 'output window, operand 0']
    #allocation7 [shape = 's32[2]{0}', space=sflag, size = 0x8, scoped, tag = 'scoped memory for trainer_forward.17']
    %27 = vsyncpa [#allocation7], 0
    %s28 = scalar_lea.sflag [#allocation7], 1
    %29 = vsyncpa %s28, 0
    loop: start=0, step=1, limit=4
    $region2: #{trainer_forward.17} parent=1 // loop_pre_header
      _
    $region3: #{trainer_forward.17} parent=1 // loop_header
      %s31 = sphi 0, %s35
      %p32 = scmp.ge.s32.totalorder %s31, 4
      %s41 = sphi 0, %s43
      %s44 = sphi 0, %s41
      %s45 = sphi 0, %s44
      %s61 = sphi 0, %s45
      %s67 = sphi 0, %s69
      %s70 = sphi 0, %s67
      %s71 = sphi 0, %s70
      %s87 = sphi 0, %s71
      %s93 = sphi 0, %s95
      %s96 = sphi 0, %s93
      %s97 = sphi 0, %s96
      %s113 = sphi 0, %s97
      %s117 = sphi 0, %s117
      %s119 = sphi 0, %s117
      %s120 = sphi 0, %s119
      %s134 = sphi 0, %s120
      %s138 = sphi 0, %s138
      %s140 = sphi 0, %s138
      %s141 = sphi 0, %s140
      %s155 = sphi 0, %s141
      %s161 = sphi 0, %s163
      %s164 = sphi 0, %s161
      %s165 = sphi 0, %s164
      %s181 = sphi 0, %s165
    $region4: #{trainer_forward.17} parent=1 // loop_header_branch
      %34 = sbr.rel (%p32) target = $region8
    $region5: #{trainer_forward.17} parent=1 // loop_body
      %s36 = ssub.s32 %s31, 1
      %s37 = ssub.s32 %s31, 2
      %s38 = sadd.s32 %s31, 1
      %s39 = ssub.s32 %s31, %s38
      %p40 = scmp.eq.s32.totalorder %s39, 0
      %s42 = sadd.s32 %s41, 1
      %s43 = scalar_select %p40, %s41, %s42
      %p46 = pneg %p40
      %p47 = scmp.eq.s32.totalorder %s31, 1
      %p48 = por %p46, %p47
      %p49 = scmp.ne.s32.totalorder %s41, %s44
      %p50 = scmp.eq.s32.totalorder %s31, 0
      %p51 = por %p49, %p50
      %p52 = scmp.ne.s32.totalorder %s41, %s44
      %p53 = scmp.eq.s32.totalorder %s36, 1
      %p54 = por %p52, %p53
      %p55 = scmp.ne.s32.totalorder %s44, %s45
      %p56 = scmp.eq.s32.totalorder %s36, 0
      %p57 = por %p55, %p56
      %p58 = scmp.ne.s32.totalorder %s44, %s45
      %p59 = scmp.eq.s32.totalorder %s37, 1
      %p60 = por %p58, %p59
      %p62 = scmp.ne.s32.totalorder %s45, %s61
      %p63 = scmp.eq.s32.totalorder %s37, 0
      %p64 = por %p62, %p63
      %s65 = ssub.s32 %s31, %s38
      %p66 = scmp.eq.s32.totalorder %s65, 0
      %s68 = sadd.s32 %s67, 1
      %s69 = scalar_select %p66, %s67, %s68
      %p72 = pneg %p66
      %p73 = scmp.eq.s32.totalorder %s31, 1
      %p74 = por %p72, %p73
      %p75 = scmp.ne.s32.totalorder %s67, %s70
      %p76 = scmp.eq.s32.totalorder %s31, 0
      %p77 = por %p75, %p76
      %p78 = scmp.ne.s32.totalorder %s67, %s70
      %p79 = scmp.eq.s32.totalorder %s36, 1
      %p80 = por %p78, %p79
      %p81 = scmp.ne.s32.totalorder %s70, %s71
      %p82 = scmp.eq.s32.totalorder %s36, 0
      %p83 = por %p81, %p82
      %p84 = scmp.ne.s32.totalorder %s70, %s71
      %p85 = scmp.eq.s32.totalorder %s37, 1
      %p86 = por %p84, %p85
      %p88 = scmp.ne.s32.totalorder %s71, %s87
      %p89 = scmp.eq.s32.totalorder %s37, 0
      %p90 = por %p88, %p89
      %s91 = ssub.s32 %s31, %s38
      %p92 = scmp.eq.s32.totalorder %s91, 0
      %s94 = sadd.s32 %s93, 1
      %s95 = scalar_select %p92, %s93, %s94
      %p98 = pneg %p92
      %p99 = scmp.eq.s32.totalorder %s31, 1
      %p100 = por %p98, %p99
      %p101 = scmp.ne.s32.totalorder %s93, %s96
      %p102 = scmp.eq.s32.totalorder %s31, 0
      %p103 = por %p101, %p102
      %p104 = scmp.ne.s32.totalorder %s93, %s96
      %p105 = scmp.eq.s32.totalorder %s36, 1
      %p106 = por %p104, %p105
      %p107 = scmp.ne.s32.totalorder %s96, %s97
      %p108 = scmp.eq.s32.totalorder %s36, 0
      %p109 = por %p107, %p108
      %p110 = scmp.ne.s32.totalorder %s96, %s97
      %p111 = scmp.eq.s32.totalorder %s37, 1
      %p112 = por %p110, %p111
      %p114 = scmp.ne.s32.totalorder %s97, %s113
      %p115 = scmp.eq.s32.totalorder %s37, 0
      %p116 = por %p114, %p115
      %s118 = sadd.s32 %s117, 1
      %p121 = scmp.eq.s32.totalorder %s31, 1
      %p122 = scmp.ne.s32.totalorder %s117, %s119
      %p123 = scmp.eq.s32.totalorder %s31, 0
      %p124 = por %p122, %p123
      %p125 = scmp.ne.s32.totalorder %s117, %s119
      %p126 = scmp.eq.s32.totalorder %s36, 1
      %p127 = por %p125, %p126
      %p128 = scmp.ne.s32.totalorder %s119, %s120
      %p129 = scmp.eq.s32.totalorder %s36, 0
      %p130 = por %p128, %p129
      %p131 = scmp.ne.s32.totalorder %s119, %s120
      %p132 = scmp.eq.s32.totalorder %s37, 1
      %p133 = por %p131, %p132
      %p135 = scmp.ne.s32.totalorder %s120, %s134
      %p136 = scmp.eq.s32.totalorder %s37, 0
      %p137 = por %p135, %p136
      %s139 = sadd.s32 %s138, 1
      %p142 = scmp.eq.s32.totalorder %s31, 1
      %p143 = scmp.ne.s32.totalorder %s138, %s140
      %p144 = scmp.eq.s32.totalorder %s31, 0
      %p145 = por %p143, %p144
      %p146 = scmp.ne.s32.totalorder %s138, %s140
      %p147 = scmp.eq.s32.totalorder %s36, 1
      %p148 = por %p146, %p147
      %p149 = scmp.ne.s32.totalorder %s140, %s141
      %p150 = scmp.eq.s32.totalorder %s36, 0
      %p151 = por %p149, %p150
      %p152 = scmp.ne.s32.totalorder %s140, %s141
      %p153 = scmp.eq.s32.totalorder %s37, 1
      %p154 = por %p152, %p153
      %p156 = scmp.ne.s32.totalorder %s141, %s155
      %p157 = scmp.eq.s32.totalorder %s37, 0
      %p158 = por %p156, %p157
      %s159 = ssub.s32 %s31, %s38
      %p160 = scmp.eq.s32.totalorder %s159, 0
      %s162 = sadd.s32 %s161, 1
      %s163 = scalar_select %p160, %s161, %s162
      %p166 = pneg %p160
      %p167 = scmp.eq.s32.totalorder %s31, 1
      %p168 = por %p166, %p167
      %p169 = scmp.ne.s32.totalorder %s161, %s164
      %p170 = scmp.eq.s32.totalorder %s31, 0
      %p171 = por %p169, %p170
      %p172 = scmp.ne.s32.totalorder %s161, %s164
      %p173 = scmp.eq.s32.totalorder %s36, 1
      %p174 = por %p172, %p173
      %p175 = scmp.ne.s32.totalorder %s164, %s165
      %p176 = scmp.eq.s32.totalorder %s36, 0
      %p177 = por %p175, %p176
      %p178 = scmp.ne.s32.totalorder %s164, %s165
      %p179 = scmp.eq.s32.totalorder %s37, 1
      %p180 = por %p178, %p179
      %p182 = scmp.ne.s32.totalorder %s165, %s181
      %p183 = scmp.eq.s32.totalorder %s37, 0
      %p184 = por %p182, %p183
      %p185 = scmp.le.s32.totalorder 1, %s31
      %p186 = scmp.lt.s32.totalorder %s31, 3
      %p187 = pnand %p185, %p186
      %p188 = pneg %p187
      // Predicated region
      $region9: #{trainer_forward.17} parent=5 // pred_check
        _
      $region10: #{trainer_forward.17} parent=5 // pred_check_branch
        %190 = sbr.rel (%p187) target = $region12
      $region11: #{trainer_forward.17} parent=5 // pred_region
        %s191 = ssub.s32 %s31, 1
        // Predicated region
        $region13: #{trainer_forward.17} parent=11 // pred_check
          %p192 = pneg %p130
        $region14: #{trainer_forward.17} parent=11 // pred_check_branch
          %194 = sbr.rel (%p192) target = $region16
        $region15: #{trainer_forward.17} parent=11 // pred_region
          _
        $region16: #{trainer_forward.17} parent=11 // pred_fallthru
          _
        // Predicated region
        $region17: #{trainer_forward.17} parent=11 // pred_check
          %p195 = pneg %p151
        $region18: #{trainer_forward.17} parent=11 // pred_check_branch
          %197 = sbr.rel (%p195) target = $region20
        $region19: #{trainer_forward.17} parent=11 // pred_region
          _
        $region20: #{trainer_forward.17} parent=11 // pred_fallthru
          _
      $region12: #{trainer_forward.17} parent=5 // pred_fallthru
        _
      %p198 = scmp.lt.s32.totalorder %s31, 2
      // Predicated region
      $region21: #{trainer_forward.17} parent=5 // pred_check
        %p199 = pneg %p198
      $region22: #{trainer_forward.17} parent=5 // pred_check_branch
        %201 = sbr.rel (%p199) target = $region24
      $region23: #{trainer_forward.17} parent=5 // pred_region
        // Predicated region
        $region25: #{trainer_forward.17} parent=23 // pred_check
          %p202 = pneg %p51
        $region26: #{trainer_forward.17} parent=23 // pred_check_branch
          %204 = sbr.rel (%p202) target = $region28
        $region27: #{trainer_forward.17} parent=23 // pred_region
          %p205 = scmp.lt.s32.totalorder %s31, 1
          %s206 = scalar_select %p205, %s31, 1
          %s207 = smul.addr %s206, 2
          %s208 = smul.addr %s207, 8
          %s209 = scalar_lea.vmem %s3, %s208
        $region28: #{trainer_forward.17} parent=23 // pred_fallthru
          _
        // Predicated region
        $region29: #{trainer_forward.17} parent=23 // pred_check
          %p210 = pneg %p77
        $region30: #{trainer_forward.17} parent=23 // pred_check_branch
          %212 = sbr.rel (%p210) target = $region32
        $region31: #{trainer_forward.17} parent=23 // pred_region
          %p213 = scmp.lt.s32.totalorder %s31, 1
          %s214 = scalar_select %p213, %s31, 1
          %s215 = smul.addr %s214, 2
          %s216 = smul.addr %s215, 8
          %s217 = scalar_lea.vmem %s4, %s216
        $region32: #{trainer_forward.17} parent=23 // pred_fallthru
          _
        // Predicated region
        $region33: #{trainer_forward.17} parent=23 // pred_check
          %p218 = pneg %p103
        $region34: #{trainer_forward.17} parent=23 // pred_check_branch
          %220 = sbr.rel (%p218) target = $region36
        $region35: #{trainer_forward.17} parent=23 // pred_region
          %p221 = scmp.lt.s32.totalorder %s31, 1
          %s222 = scalar_select %p221, %s31, 1
          %s223 = scalar_lea.vmem %s5, %s222
        $region36: #{trainer_forward.17} parent=23 // pred_fallthru
          _
      $region24: #{trainer_forward.17} parent=5 // pred_fallthru
        _
      %p224 = scmp.le.s32.totalorder 1, %s31
      %p225 = scmp.lt.s32.totalorder %s31, 3
      %p226 = pnand %p224, %p225
      %p227 = pneg %p226
      // Predicated region
      $region37: #{trainer_forward.17} parent=5 // pred_check
        _
      $region38: #{trainer_forward.17} parent=5 // pred_check_branch
        %229 = sbr.rel (%p226) target = $region40
      $region39: #{trainer_forward.17} parent=5 // pred_region
        %s230 = ssub.s32 %s31, 1
        %p231 = scmp.lt.s32.totalorder %s36, 1
        %s232 = scalar_select %p231, %s36, 1
        %s233 = smul.addr %s232, 2
        %s234 = smul.addr %s233, 8
        %s235 = scalar_lea.vmem %s3, %s234
        %p236 = pneg %p57
        %p237 = pneg %p54
        %p238 = scmp.lt.s32.totalorder %s36, 1
        %s239 = scalar_select %p238, %s36, 1
        %s240 = smul.addr %s239, 2
        %s241 = smul.addr %s240, 8
        %s242 = scalar_lea.vmem %s4, %s241
        %p243 = pneg %p83
        %p244 = pneg %p80
        %p245 = scmp.lt.s32.totalorder %s36, 1
        %s246 = scalar_select %p245, %s36, 1
        %s247 = scalar_lea.vmem %s5, %s246
        %p248 = pneg %p109
        %p249 = pneg %p106
        %p250 = pneg %p130
        %p251 = pneg %p127
        %p252 = pneg %p151
        %p253 = pneg %p148
        %p254 = pneg %p177
        %p255 = pneg %p174
        %s256 = sand.u32 %s164, 1
        %s257 = scalar_lea.sflag [#allocation7], %s256
        %s258 = sand.u32 %s164, 1
        %s259 = smul.addr %s258, 16
        %s260 = scalar_lea.vmem [#allocation6], %s259
        %p261 = scmp.lt.s32.totalorder %s36, 1
        %s262 = scalar_select %p261, %s36, 1
        %s263 = smul.addr %s262, 2
        %s264 = smul.addr %s263, 8
        %s265 = scalar_lea.vmem %s3, %s264
        %p266 = scmp.lt.s32.totalorder %s36, 1
        %s267 = scalar_select %p266, %s36, 1
        %s268 = smul.addr %s267, 2
        %s269 = smul.addr %s268, 8
        %s270 = scalar_lea.vmem %s4, %s269
        %p271 = scmp.lt.s32.totalorder %s36, 1
        %s272 = scalar_select %p271, %s36, 1
        %s273 = scalar_lea.vmem %s5, %s272
        %s275 = sld [smem:[#allocation3 + %s36]]
        %s276 = sld [smem:[#allocation4 + %s275]]
        %s277 = sld [smem:[#allocation5 + %s275]]
        %v278 = vld [vmem:[%s265] sm:$0xff]
        %v279 = vld [vmem:[%s265 + $0x8] sm:$0xff]
        %v280 = vld [vmem:[%s270] sm:$0xff]
        %v281 = vld [vmem:[%s270 + $0x8] sm:$0xff]
        %v282 = vstv %s276
        %v283 = vmul.f32 %v282, %v278
        %v284 = vmul.f32 %v282, %v279
        %v285 = vstv %s277
        %v286 = vmul.f32 %v285, %v280
        %v287 = vmul.f32 %v285, %v281
        %v288 = vadd.f32 %v283, %v286
        %v289 = vadd.f32 %v284, %v287
        %v290 = vpack.c.bf16 %v289, %v288
        %v291 = vld [vmem:[%s6] sm:$0xf]
        %v292 = vld [vmem:[%s6 + $0x4] sm:$0xf]
        %v293 = vld [vmem:[%s6 + $0x8] sm:$0xf]
        %v294 = vld [vmem:[%s6 + $0xc] sm:$0xf]
        %v295 = vld [vmem:[%s6 + $0x10] sm:$0xf]
        %v296 = vld [vmem:[%s6 + $0x14] sm:$0xf]
        %v297 = vld [vmem:[%s6 + $0x18] sm:$0xf]
        %v298 = vld [vmem:[%s6 + $0x1c] sm:$0xf]
        %v299 = vld [vmem:[%s6 + $0x20] sm:$0xf]
        %v300 = vld [vmem:[%s6 + $0x24] sm:$0xf]
        %v301 = vld [vmem:[%s6 + $0x28] sm:$0xf]
        %v302 = vld [vmem:[%s6 + $0x2c] sm:$0xf]
        %v303 = vld [vmem:[%s6 + $0x30] sm:$0xf]
        %v304 = vld [vmem:[%s6 + $0x34] sm:$0xf]
        %v305 = vld [vmem:[%s6 + $0x38] sm:$0xf]
        %v306 = vld [vmem:[%s6 + $0x3c] sm:$0xf]
        %v307 = vld [vmem:[%s273] sm:$0x1]
        %v309 = vlaneseq
        %v310 = vshrl.u32 %v309, 7
        %v311 = vsub.s32 0, %v310
        %v312 = vrot.slane %v307, %v311
        %v330 = vunpack.c.l.b16 %v291
        %v331 = vunpack.c.l.b16 %v292
        %v332 = vunpack.c.l.b16 %v293
        %v333 = vunpack.c.l.b16 %v294
        %v334 = vunpack.c.l.b16 %v295
        %v335 = vunpack.c.l.b16 %v296
        %v336 = vunpack.c.l.b16 %v297
        %v337 = vunpack.c.l.b16 %v298
        %v338 = vunpack.c.l.b16 %v299
        %v339 = vunpack.c.l.b16 %v300
        %v340 = vunpack.c.l.b16 %v301
        %v341 = vunpack.c.l.b16 %v302
        %v342 = vunpack.c.l.b16 %v303
        %v343 = vunpack.c.l.b16 %v304
        %v344 = vunpack.c.l.b16 %v305
        %v345 = vunpack.c.l.b16 %v306
        %v346 = vpack.c.b16 %v331, %v330
        %v347 = vpack.c.b16 %v333, %v332
        %v348 = vpack.c.b16 %v335, %v334
        %v349 = vpack.c.b16 %v337, %v336
        %v350 = vpack.c.b16 %v339, %v338
        %v351 = vpack.c.b16 %v341, %v340
        %v352 = vpack.c.b16 %v343, %v342
        %v353 = vpack.c.b16 %v345, %v344
        %362 = vmatprep.subr.bf16.mxu0 0
        %363 = vmatpush1.bf16.msra.mxu0 %v346
        %364 = vmatprep.subr.bf16.mxu0 0
        %365 = vmatpush1.bf16.msra.mxu0 %v347
        %366 = vmatprep.subr.bf16.mxu0 0
        %367 = vmatpush1.bf16.msra.mxu0 %v348
        %368 = vmatprep.subr.bf16.mxu0 0
        %369 = vmatpush1.bf16.msra.mxu0 %v349
        %370 = vmatprep.subr.bf16.mxu0 0
        %371 = vmatpush1.bf16.msra.mxu0 %v350
        %372 = vmatprep.subr.bf16.mxu0 0
        %373 = vmatpush1.bf16.msra.mxu0 %v351
        %374 = vmatprep.subr.bf16.mxu0 0
        %375 = vmatpush1.bf16.msra.mxu0 %v352
        %376 = vmatprep.subr.bf16.mxu0 0
        %377 = vmatpush1.bf16.msra.mxu0 %v353
        %378 = vmatprep.subr.bf16.mxu0 0
        %379 = vmatpush1.bf16.msra.mxu0 0
        %380 = vmatprep.subr.bf16.mxu0 0
        %381 = vmatpush1.bf16.msra.mxu0 0
        %382 = vmatprep.subr.bf16.mxu0 0
        %383 = vmatpush1.bf16.msra.mxu0 0
        %384 = vmatprep.subr.bf16.mxu0 0
        %385 = vmatpush1.bf16.msra.mxu0 0
        %386 = vmatprep.subr.bf16.mxu0 0
        %387 = vmatpush1.bf16.msra.mxu0 0
        %388 = vmatprep.subr.bf16.mxu0 0
        %389 = vmatpush1.bf16.msra.mxu0 0
        %390 = vmatprep.subr.bf16.mxu0 0
        %391 = vmatpush1.bf16.msra.mxu0 0
        %392 = vmatprep.subr.bf16.mxu0 0
        %393 = vmatpush1.bf16.msra.mxu0 0
        %394 = vmatprep.mubr.bf16.mxu0 0
        %395 = vmatmul.mubr.bf16.gmra.mrb[0].mxu0 %v290
        %v396 = vpop.f32.mrb[0].mxu0
        %v397 = vadd.f32 %v312, %v396
        %v398 = vpop.f32.mrb[0].mxu0
        %v399 = vpop.f32.mrb[0].mxu0
        %v400 = vadd.f32 %v312, %v399
        %v401 = vpop.f32.mrb[0].mxu0
        %402 = vdwg.mxu0
        %v403 = vmax.f32 %v397, 0.0
        %v404 = vmax.f32 %v400, 0.0
        %v405 = vpack.c.bf16 %v404, %v403
        %v406 = vld [vmem:[%s7] sm:$0xf]
        %v407 = vld [vmem:[%s7 + $0x4] sm:$0xf]
        %v408 = vld [vmem:[%s7 + $0x8] sm:$0xf]
        %v409 = vld [vmem:[%s7 + $0xc] sm:$0xf]
        %v410 = vld [vmem:[%s7 + $0x10] sm:$0xf]
        %v411 = vld [vmem:[%s7 + $0x14] sm:$0xf]
        %v412 = vld [vmem:[%s7 + $0x18] sm:$0xf]
        %v413 = vld [vmem:[%s7 + $0x1c] sm:$0xf]
        %v414 = vld [vmem:[%s7 + $0x20] sm:$0xf]
        %v415 = vld [vmem:[%s7 + $0x24] sm:$0xf]
        %v416 = vld [vmem:[%s7 + $0x28] sm:$0xf]
        %v417 = vld [vmem:[%s7 + $0x2c] sm:$0xf]
        %v418 = vld [vmem:[%s7 + $0x30] sm:$0xf]
        %v419 = vld [vmem:[%s7 + $0x34] sm:$0xf]
        %v420 = vld [vmem:[%s7 + $0x38] sm:$0xf]
        %v421 = vld [vmem:[%s7 + $0x3c] sm:$0xf]
        %v438 = vunpack.c.l.b16 %v406
        %v439 = vunpack.c.l.b16 %v407
        %v440 = vunpack.c.l.b16 %v408
        %v441 = vunpack.c.l.b16 %v409
        %v442 = vunpack.c.l.b16 %v410
        %v443 = vunpack.c.l.b16 %v411
        %v444 = vunpack.c.l.b16 %v412
        %v445 = vunpack.c.l.b16 %v413
        %v446 = vunpack.c.l.b16 %v414
        %v447 = vunpack.c.l.b16 %v415
        %v448 = vunpack.c.l.b16 %v416
        %v449 = vunpack.c.l.b16 %v417
        %v450 = vunpack.c.l.b16 %v418
        %v451 = vunpack.c.l.b16 %v419
        %v452 = vunpack.c.l.b16 %v420
        %v453 = vunpack.c.l.b16 %v421
        %v454 = vpack.c.b16 %v439, %v438
        %v455 = vpack.c.b16 %v441, %v440
        %v456 = vpack.c.b16 %v443, %v442
        %v457 = vpack.c.b16 %v445, %v444
        %v458 = vpack.c.b16 %v447, %v446
        %v459 = vpack.c.b16 %v449, %v448
        %v460 = vpack.c.b16 %v451, %v450
        %v461 = vpack.c.b16 %v453, %v452
        %470 = vmatprep.subr.bf16.mxu0 0
        %471 = vmatpush1.bf16.msra.mxu0 %v454
        %472 = vmatprep.subr.bf16.mxu0 0
        %473 = vmatpush1.bf16.msra.mxu0 %v455
        %474 = vmatprep.subr.bf16.mxu0 0
        %475 = vmatpush1.bf16.msra.mxu0 %v456
        %476 = vmatprep.subr.bf16.mxu0 0
        %477 = vmatpush1.bf16.msra.mxu0 %v457
        %478 = vmatprep.subr.bf16.mxu0 0
        %479 = vmatpush1.bf16.msra.mxu0 %v458
        %480 = vmatprep.subr.bf16.mxu0 0
        %481 = vmatpush1.bf16.msra.mxu0 %v459
        %482 = vmatprep.subr.bf16.mxu0 0
        %483 = vmatpush1.bf16.msra.mxu0 %v460
        %484 = vmatprep.subr.bf16.mxu0 0
        %485 = vmatpush1.bf16.msra.mxu0 %v461
        %486 = vmatprep.subr.bf16.mxu0 0
        %487 = vmatpush1.bf16.msra.mxu0 0
        %488 = vmatprep.subr.bf16.mxu0 0
        %489 = vmatpush1.bf16.msra.mxu0 0
        %490 = vmatprep.subr.bf16.mxu0 0
        %491 = vmatpush1.bf16.msra.mxu0 0
        %492 = vmatprep.subr.bf16.mxu0 0
        %493 = vmatpush1.bf16.msra.mxu0 0
        %494 = vmatprep.subr.bf16.mxu0 0
        %495 = vmatpush1.bf16.msra.mxu0 0
        %496 = vmatprep.subr.bf16.mxu0 0
        %497 = vmatpush1.bf16.msra.mxu0 0
        %498 = vmatprep.subr.bf16.mxu0 0
        %499 = vmatpush1.bf16.msra.mxu0 0
        %500 = vmatprep.subr.bf16.mxu0 0
        %501 = vmatpush1.bf16.msra.mxu0 0
        %502 = vmatprep.mubr.bf16.mxu0 0
        %503 = vmatmul.mubr.bf16.gmra.mrb[0].mxu0 %v405
        %v504 = vpop.f32.mrb[0].mxu0
        %v505 = vadd.f32 0.0, %v504
        %v506 = vpop.f32.mrb[0].mxu0
        %v507 = vpop.f32.mrb[0].mxu0
        %v508 = vadd.f32 0.0, %v507
        %v509 = vpop.f32.mrb[0].mxu0
        %510 = vdwg.mxu0
        %v511 = vsub.f32 %v505, %v280
        %v512 = vsub.f32 %v508, %v281
        %v513 = vmul.f32 %v511, %v511
        %v514 = vmul.f32 %v512, %v512
        %515 = vst [vmem:[%s260] sm:$0xff] %v513
        %516 = vst [vmem:[%s260 + $0x8] sm:$0xff] %v514
        %s517 = sand.u32 %s164, 1
        %s518 = scalar_lea.sflag [#allocation7], %s517
        %s519 = sand.u32 %s164, 1
        %s520 = smul.addr %s519, 16
        %s521 = scalar_lea.vmem [#allocation6], %s520
        // Predicated region
        $region41: #{trainer_forward.17} parent=39 // pred_check
          %p522 = pneg %p174
        $region42: #{trainer_forward.17} parent=39 // pred_check_branch
          %524 = sbr.rel (%p522) target = $region44
        $region43: #{trainer_forward.17} parent=39 // pred_region
          %s526 = ssub.s32 256, 256
          %527 = vsyncadd %s518, %s526
          %s528 = smul.addr %s36, 2
          %s529 = smul.addr %s528, 128
          %s530 = scalar_lea.hbm %s8, %s529
          %s531 = sshll.u32 %s521, 4
          %s532 = int_to_ptr.vmem [resolvable:$true] %s531
          %537 = dma.vmem_to_hbm [thread:$0]  %s532, 256, %s530, %s518, 128, 128, 8
        $region44: #{trainer_forward.17} parent=39 // pred_fallthru
          _
      $region40: #{trainer_forward.17} parent=5 // pred_fallthru
        _
      %p538 = scmp.le.s32.totalorder 2, %s31
      // Predicated region
      $region45: #{trainer_forward.17} parent=5 // pred_check
        %p539 = pneg %p538
      $region46: #{trainer_forward.17} parent=5 // pred_check_branch
        %541 = sbr.rel (%p539) target = $region48
      $region47: #{trainer_forward.17} parent=5 // pred_region
        %s542 = ssub.s32 %s31, 2
        // Predicated region
        $region49: #{trainer_forward.17} parent=47 // pred_check
          %p543 = pneg %p180
        $region50: #{trainer_forward.17} parent=47 // pred_check_branch
          %545 = sbr.rel (%p543) target = $region52
        $region51: #{trainer_forward.17} parent=47 // pred_region
          %s546 = sand.u32 %s165, 1
          %s547 = scalar_lea.sflag [#allocation7], %s546
          %s548 = sand.u32 %s165, 1
          %s549 = smul.addr %s548, 16
          %s550 = scalar_lea.vmem [#allocation6], %s549
          %551 = dma.done %s547, 256
        $region52: #{trainer_forward.17} parent=47 // pred_fallthru
          _
      $region48: #{trainer_forward.17} parent=5 // pred_fallthru
        _
    $region6: #{trainer_forward.17} parent=1 // loop_footer
      %s35 = sadd.s32 1, %s31
    $region7: #{trainer_forward.17} parent=1 // loop_footer_branch
      %30 = sbr.rel target = $region3
    $region8: #{trainer_forward.17} parent=1 // loop_exit
      _
    %552 = vsyncpa [#allocation7], 1
    %s553 = scalar_lea.sflag [#allocation7], 1
    %554 = vsyncpa %s553, 1

</llo_original>
